<compile_context>
chip_gen: v7x
topology: tpu7x:2x2x1
jax: 0.10.0
libtpu: 0.0.40
codegen_flags: <defaults>
</compile_context>

<pallas_src>
import functools

import jax
import jax.numpy as jnp
from jax.experimental import pallas as pl
from jax.experimental.pallas import tpu as pltpu


_LANE = 128              # pad feature dims to the vreg lane width
_SUBLANE = 8             # f32 sublane granularity for the batch tile
_VMEM_BUDGET = 10 << 20  # target footprint: safely under v5e's 16 MiB default


def _round_up(x, m):
    return ((x + m - 1) // m) * m


def _cdiv(a, b):
    return -(-a // b)


def _fused_soft_hebb_kernel(x_ref, w1_ref, w2_ref, o_ref, *, hsize, out_dim):
    """Fused two-layer soft-Hebb forward for one batch tile.

      h = softmax(x @ W1)   (softmax restricted to the first `hsize` lanes)
      y = softmax(h @ W2)   (softmax restricted to the first `out_dim` lanes)
    """
    neg = jnp.float32(-1e30)  # effectively -inf for f32 softmax masking

    # In-kernel f32 -> bf16 cast: x crosses HBM exactly once, as f32.
    x = x_ref[...].astype(jnp.bfloat16)   # (TB, D_in)
    w1 = w1_ref[...]                      # (D_in, H_pad)  bf16, lane-padded
    w2 = w2_ref[...]                      # (H_pad, O_pad) bf16, lane-padded

    # ---- layer "hebb1": linear + soft winner-take-all ---------------------
    u1 = jnp.dot(x, w1, preferred_element_type=jnp.float32)   # (TB, H_pad) f32
    h_pad = u1.shape[-1]
    if hsize != h_pad:
        # One bias row (0 for valid lanes, -1e30 for padded), broadcast-added.
        lane1 = jax.lax.broadcasted_iota(jnp.int32, (1, h_pad), 1)
        u1 = u1 + jnp.where(lane1 < hsize, 0.0, neg)
    m1 = jnp.max(u1, axis=-1, keepdims=True)
    e1 = jnp.exp(u1 - m1)
    h = e1 * pl.reciprocal(jnp.sum(e1, axis=-1, keepdims=True), approx=True)

    # ---- layer "out": linear + soft winner-take-all ------------------------
    u2 = jnp.dot(h.astype(w2.dtype), w2, preferred_element_type=jnp.float32)
    o_pad = u2.shape[-1]
    if out_dim != o_pad:
        lane2 = jax.lax.broadcasted_iota(jnp.int32, (1, o_pad), 1)
        u2 = u2 + jnp.where(lane2 < out_dim, 0.0, neg)
    m2 = jnp.max(u2, axis=-1, keepdims=True)
    e2 = jnp.exp(u2 - m2)
    # Exact reciprocal on the final probabilities so rows sum to 1 in f32.
    y = e2 * pl.reciprocal(jnp.sum(e2, axis=-1, keepdims=True), approx=False)

    # Store only the useful lanes (output block last dim == full array dim).
    o_ref[...] = y[:, :out_dim].astype(o_ref.dtype)


def _plan_tiles(B, d_in, h_pad, o_pad, out_dim):
    """Pick the batch tile TB and the scoped-VMEM request from a byte budget."""
    w_bytes = (d_in * h_pad + h_pad * o_pad) * 2      # bf16 weights, 1 buffer
    # Per batch row: double-buffered f32 x tile + double-buffered f32 out tile
    # + ~6 H_pad-wide f32 temporaries for the two softmaxes.
    per_row = 2 * d_in * 4 + 2 * out_dim * 4 + 6 * h_pad * 4
    tb_max = max(_VMEM_BUDGET - w_bytes, per_row * _SUBLANE) // per_row
    tb_max = max(_SUBLANE, (tb_max // _SUBLANE) * _SUBLANE)
    tb_max = min(tb_max, 1024)     # per-grid-step overhead is tiny past ~1K rows

    n_tiles = _cdiv(B, tb_max)
    if B >= 4 * _SUBLANE:
        # >=2 tiles (and an even count) so v7x megacore splits the batch evenly;
        # harmless on single-TC v5e/v6e.
        n_tiles = max(n_tiles, 2)
        n_tiles += n_tiles % 2
    tb = _round_up(_cdiv(B, n_tiles), _SUBLANE)

    # Explicit scoped-VMEM request: footprint (weights counted twice in case
    # the single-buffer hint is not honoured) + headroom.  Never below the
    # 32 MiB default of newer parts, never above v7x's 64 MiB physical VMEM.
    est = 2 * w_bytes + tb * per_row + (1 << 20)
    vmem_limit = int(min(max(est, 32 << 20), 64 << 20))
    return tb, vmem_limit


@functools.partial(jax.jit, static_argnames=("hsize", "out_dim"))
def fused_soft_hebb_forward(x, w1_pad, w2_pad, *, hsize, out_dim):
    """Fused forward through both soft-Hebb layers.

    x:      (B, D_in)        float32 (cast to bf16 inside the kernel)
    w1_pad: (D_in, H_pad)    bfloat16, columns >= hsize are zero
    w2_pad: (H_pad, O_pad)   bfloat16, rows >= hsize / cols >= out_dim are zero
    returns (B, out_dim) float32 probabilities.
    """
    B, d_in = x.shape
    d_in_w, h_pad = w1_pad.shape
    h_pad_w, o_pad = w2_pad.shape
    assert d_in == d_in_w and h_pad == h_pad_w

    tb, vmem_limit = _plan_tiles(B, d_in, h_pad, o_pad, out_dim)
    grid = (_cdiv(B, tb),)

    kernel = functools.partial(_fused_soft_hebb_kernel,
                               hsize=hsize, out_dim=out_dim)

    cost = pl.CostEstimate(
        flops=2 * B * d_in * h_pad + 2 * B * h_pad * o_pad,
        transcendentals=B * (h_pad + o_pad),
        bytes_accessed=B * d_in * 4
        + (d_in * h_pad + h_pad * o_pad) * 2
        + B * out_dim * 4,
    )

    # TODO(synk): for very large in_dim (D_in >~ 16K) add a K-reduction grid
    # axis with an f32 VMEM accumulator for u1 instead of shrinking TB.
    return pl.pallas_call(
        kernel,
        out_shape=jax.ShapeDtypeStruct((B, out_dim), jnp.float32),
        grid=grid,
        in_specs=[
            pl.BlockSpec((tb, d_in), lambda i: (i, 0)),            # batch tile (f32)
            pl.BlockSpec((d_in, h_pad), lambda i: (0, 0),
                         pipeline_mode=pl.Buffered(1)),            # W1 VMEM-resident
            pl.BlockSpec((h_pad, o_pad), lambda i: (0, 0),
                         pipeline_mode=pl.Buffered(1)),            # W2 VMEM-resident
        ],
        out_specs=pl.BlockSpec((tb, out_dim), lambda i: (i, 0)),
        compiler_params=pltpu.CompilerParams(
            # Batch tiles are independent -> shard across TCs (v7x megacore).
            dimension_semantics=("parallel",),
            vmem_limit_bytes=vmem_limit,
        ),
        cost_estimate=cost,
    )(x, w1_pad, w2_pad)


class SoftNeuralNetPallas:
    """JAX/Pallas mirror of SoftNeuralNet: an ordered dict of soft-Hebb layers."""

    def __init__(self, hsize, in_dim, output_dim=10, key=None):
        if key is None:
            key = jax.random.PRNGKey(0)
        self.iteration = 3              # training hyperparameter; unused in forward
        self.output_dim = output_dim
        self.hsize = hsize
        self.in_dim = in_dim
        self.layers = {}                # name -> weight (D_in, D_out), float32
        self._packed = None             # cached lane-padded bf16 weights

        k1, k2 = jax.random.split(key)
        # Deterministic init; SoftHebb layers keep unit-norm incoming weights.
        w1 = jax.random.normal(k1, (in_dim, hsize), dtype=jnp.float32)
        w1 = w1 / jnp.linalg.norm(w1, axis=0, keepdims=True)
        w2 = jax.random.normal(k2, (hsize, output_dim), dtype=jnp.float32)
        w2 = w2 / jnp.linalg.norm(w2, axis=0, keepdims=True)
        self.add_layer("hebb1", w1)
        self.add_layer("out", w2)

    def add_layer(self, name, weight):
        self.layers[name] = weight
        self._packed = None             # invalidate padded-weight cache

    def set_iteration(self, i):
        self.iteration = i

    def _pack_weights(self):
        """Build lane-padded bf16 weights for the fused 2-layer kernel."""
        assert len(self.layers) == 2, "fused kernel covers the 2-layer network"
        w1, w2 = list(self.layers.values())
        d_in, hsize = w1.shape
        hsize2, out_dim = w2.shape
        assert hsize == hsize2
        h_pad = _round_up(hsize, _LANE)
        o_pad = _round_up(out_dim, _LANE)
        w1_pad = jnp.zeros((d_in, h_pad), jnp.bfloat16)
        w1_pad = w1_pad.at[:, :hsize].set(w1.astype(jnp.bfloat16))
        w2_pad = jnp.zeros((h_pad, o_pad), jnp.bfloat16)
        w2_pad = w2_pad.at[:hsize, :out_dim].set(w2.astype(jnp.bfloat16))
        self._packed = (w1_pad, w2_pad, hsize, out_dim)

    def forward(self, x, clamped=None):
        # `clamped` only affects the Hebbian *update*, not the inference path.
        # TODO(synk): per-layer Hebbian plasticity update (weight change) is a
        # training-time side effect and is not part of this forward kernel.
        if x.ndim > 2:
            x = x.reshape(x.shape[0], -1)   # flatten NCHW -> (B, C*H*W)
        if x.dtype != jnp.float32:
            x = x.astype(jnp.float32)       # kernel casts f32 -> bf16 internally
        if self._packed is None:
            self._pack_weights()
        w1_pad, w2_pad, hsize, out_dim = self._packed
        return fused_soft_hebb_forward(x, w1_pad, w2_pad,
                                       hsize=hsize, out_dim=out_dim)

    def forward_test(self, x):
        return self.forward(x)


if __name__ == "__main__":
    key = jax.random.PRNGKey(0)
    k_in, k_model = jax.random.split(key)

    # Small, module-consistent shapes: batch=2, NCHW image input (2, 4, 16, 16),
    # hidden size hsize=32, output_dim=10.
    B, C, H, W = 2, 4, 16, 16
    hsize = 32
    x = jax.random.normal(k_in, (B, C, H, W), dtype=jnp.float32)

    net = SoftNeuralNetPallas(hsize=hsize, in_dim=C * H * W, output_dim=10,
                              key=k_model)
    out = net.forward(x)
    out = jax.block_until_ready(out)

    assert out.shape == (B, 10)
    # Softmax rows must sum to one (final layer uses an exact reciprocal).
    assert bool(jnp.allclose(jnp.sum(out, axis=-1), 1.0, atol=1e-4))

    # Reference check (plain JAX, f32 matmul): generous tolerance for the
    # bf16 MXU operands + approx reciprocal in the hidden layer.  This also
    # guards against padded-lane dilution bugs (those would be ~10x off).
    xf = x.reshape(B, -1)
    w1 = net.layers["hebb1"]
    w2 = net.layers["out"]
    ref = jax.nn.softmax(jax.nn.softmax(xf @ w1, axis=-1) @ w2, axis=-1)
    assert bool(jnp.allclose(out, ref, atol=5e-2))

    print("KERNEL_OK")
</pallas_src>

<mosaic_0001>
module attributes {stable_mosaic.version = 11 : i64} {
  func.func @_fused_soft_hebb_kernel(%arg0: i32, %arg1: memref<8x1024xf32, #tpu.memory_space<vmem>>, %arg2: memref<1024x128xbf16, #tpu.memory_space<vmem>>, %arg3: memref<128x128xbf16, #tpu.memory_space<vmem>>, %arg4: memref<8x10xf32, #tpu.memory_space<vmem>>) attributes {dimension_semantics = [#tpu.dimension_semantics<parallel>], iteration_bounds = array<i64: 1>, scalar_prefetch = 0 : i64, scratch_operands = 0 : i64, tpu.core_type = #tpu.core_type<tc>, window_params = [{transform_indices = @transform_0, window_bounds = array<i64: 8, 1024>}, {pipeline_mode = #tpu.pipeline_mode<synchronous>, transform_indices = @transform_1, window_bounds = array<i64: 1024, 128>}, {pipeline_mode = #tpu.pipeline_mode<synchronous>, transform_indices = @transform_2, window_bounds = array<i64: 128, 128>}, {transform_indices = @transform_3, window_bounds = array<i64: 8, 10>}]} {
    %c0 = arith.constant 0 : index
    %c0_0 = arith.constant 0 : index
    %0 = vector.load %arg1[%c0, %c0_0] : memref<8x1024xf32, #tpu.memory_space<vmem>>, vector<8x1024xf32>
    %1 = arith.truncf %0 : vector<8x1024xf32> to vector<8x1024xbf16>
    %c0_1 = arith.constant 0 : index
    %c0_2 = arith.constant 0 : index
    %2 = vector.load %arg2[%c0_1, %c0_2] : memref<1024x128xbf16, #tpu.memory_space<vmem>>, vector<1024x128xbf16>
    %c0_3 = arith.constant 0 : index
    %c0_4 = arith.constant 0 : index
    %3 = vector.load %arg3[%c0_3, %c0_4] : memref<128x128xbf16, #tpu.memory_space<vmem>>, vector<128x128xbf16>
    %cst = arith.constant dense<0.000000e+00> : vector<8x128xf32>
    %4 = tpu.matmul %1, %2, %cst {dimension_numbers = #tpu.dot_dimension_numbers<[1], [0], [0], [1], [0, 0, 1, 1], [], []>} : vector<8x1024xbf16>, vector<1024x128xbf16>, vector<8x128xf32> -> vector<8x128xf32>
    %5 = tpu.iota {dimensions = array<i32: 1>} : vector<1x128xi32>
    %c32_i32 = arith.constant 32 : i32
    %6 = vector.broadcast %c32_i32 : i32 to vector<1x128xi32>
    %7 = arith.cmpi slt, %5, %6 : vector<1x128xi32>
    %cst_5 = arith.constant 0.000000e+00 : f32
    %cst_6 = arith.constant -1.000000e+30 : f32
    %8 = vector.broadcast %cst_5 : f32 to vector<1x128xf32>
    %9 = vector.broadcast %cst_6 : f32 to vector<1x128xf32>
    %10 = arith.select %7, %8, %9 : vector<1x128xi1>, vector<1x128xf32>
    %11 = vector.broadcast %10 : vector<1x128xf32> to vector<8x128xf32>
    %12 = arith.addf %4, %11 : vector<8x128xf32>
    %cst_7 = arith.constant dense<0xFF800000> : vector<8xf32>
    %13 = vector.multi_reduction <maximumf>, %12, %cst_7 [1] : vector<8x128xf32> to vector<8xf32>
    %14 = vector.shape_cast %13 : vector<8xf32> to vector<8x1xf32>
    %15 = vector.broadcast %14 : vector<8x1xf32> to vector<8x128xf32>
    %16 = arith.subf %12, %15 : vector<8x128xf32>
    %17 = math.exp %16 : vector<8x128xf32>
    %cst_8 = arith.constant dense<0.000000e+00> : vector<8xf32>
    %18 = vector.multi_reduction <add>, %17, %cst_8 [1] : vector<8x128xf32> to vector<8xf32>
    %19 = vector.shape_cast %18 : vector<8xf32> to vector<8x1xf32>
    %20 = tpu.reciprocal %19 {approx = true} : vector<8x1xf32> -> vector<8x1xf32>
    %21 = vector.broadcast %20 : vector<8x1xf32> to vector<8x128xf32>
    %22 = arith.mulf %17, %21 : vector<8x128xf32>
    %23 = arith.truncf %22 : vector<8x128xf32> to vector<8x128xbf16>
    %cst_9 = arith.constant dense<0.000000e+00> : vector<8x128xf32>
    %24 = tpu.matmul %23, %3, %cst_9 {dimension_numbers = #tpu.dot_dimension_numbers<[1], [0], [0], [1], [0, 0, 1, 1], [], []>} : vector<8x128xbf16>, vector<128x128xbf16>, vector<8x128xf32> -> vector<8x128xf32>
    %25 = tpu.iota {dimensions = array<i32: 1>} : vector<1x128xi32>
    %c10_i32 = arith.constant 10 : i32
    %26 = vector.broadcast %c10_i32 : i32 to vector<1x128xi32>
    %27 = arith.cmpi slt, %25, %26 : vector<1x128xi32>
    %cst_10 = arith.constant 0.000000e+00 : f32
    %cst_11 = arith.constant -1.000000e+30 : f32
    %28 = vector.broadcast %cst_10 : f32 to vector<1x128xf32>
    %29 = vector.broadcast %cst_11 : f32 to vector<1x128xf32>
    %30 = arith.select %27, %28, %29 : vector<1x128xi1>, vector<1x128xf32>
    %31 = vector.broadcast %30 : vector<1x128xf32> to vector<8x128xf32>
    %32 = arith.addf %24, %31 : vector<8x128xf32>
    %cst_12 = arith.constant dense<0xFF800000> : vector<8xf32>
    %33 = vector.multi_reduction <maximumf>, %32, %cst_12 [1] : vector<8x128xf32> to vector<8xf32>
    %34 = vector.shape_cast %33 : vector<8xf32> to vector<8x1xf32>
    %35 = vector.broadcast %34 : vector<8x1xf32> to vector<8x128xf32>
    %36 = arith.subf %32, %35 : vector<8x128xf32>
    %37 = math.exp %36 : vector<8x128xf32>
    %cst_13 = arith.constant dense<0.000000e+00> : vector<8xf32>
    %38 = vector.multi_reduction <add>, %37, %cst_13 [1] : vector<8x128xf32> to vector<8xf32>
    %39 = vector.shape_cast %38 : vector<8xf32> to vector<8x1xf32>
    %40 = tpu.reciprocal %39 : vector<8x1xf32> -> vector<8x1xf32>
    %41 = vector.broadcast %40 : vector<8x1xf32> to vector<8x128xf32>
    %42 = arith.mulf %37, %41 : vector<8x128xf32>
    %43 = vector.extract_strided_slice %42 {offsets = [0, 0], sizes = [8, 10], strides = [1, 1]} : vector<8x128xf32> to vector<8x10xf32>
    %c0_14 = arith.constant 0 : index
    %c0_15 = arith.constant 0 : index
    %44 = vector.load %arg4[%c0_14, %c0_15] : memref<8x10xf32, #tpu.memory_space<vmem>>, vector<8x10xf32>
    tpu.vector_store %arg4[%c0_14, %c0_15], %43 {strides = array<i32>} : memref<8x10xf32, #tpu.memory_space<vmem>>, vector<8x10xf32>,
    return
  }
  func.func @transform_0(%arg0: i32) -> (i32, i32) {
    %c0_i32 = arith.constant 0 : i32
    %c0_i32_0 = arith.constant 0 : i32
    return %arg0, %c0_i32 : i32, i32
  }
  func.func @transform_1(%arg0: i32) -> (i32, i32) {
    %c0_i32 = arith.constant 0 : i32
    %c0_i32_0 = arith.constant 0 : i32
    %c0_i32_1 = arith.constant 0 : i32
    return %c0_i32, %c0_i32_0 : i32, i32
  }
  func.func @transform_2(%arg0: i32) -> (i32, i32) {
    %c0_i32 = arith.constant 0 : i32
    %c0_i32_0 = arith.constant 0 : i32
    %c0_i32_1 = arith.constant 0 : i32
    return %c0_i32, %c0_i32_0 : i32, i32
  }
  func.func @transform_3(%arg0: i32) -> (i32, i32) {
    %c0_i32 = arith.constant 0 : i32
    %c0_i32_0 = arith.constant 0 : i32
    return %arg0, %c0_i32 : i32, i32
  }
}

</mosaic_0001>

<llo_original>
// kernel: fused_soft_hebb_forward.1
$region0: #{fused_soft_hebb_forward.1}
  #allocation0 [shape = 'u32[]', space=smem, size = 0x4, offset = 0x4, fixed_abs, tag = 'smem constant byte address 0x4 - core index']
  #allocation1 [shape = 'u32[144,128]{1,0:T(1,128)}', space=vmem, size = 0x12000, scoped, tag = 'internal scratch']
  %s0 = inlined_call_operand.hbm [shape: f32[2,1024], index: 0, kind: input, shape index: {}]
  %s1 = inlined_call_operand.hbm [shape: bf16[1024,128], index: 1, kind: input, shape index: {}]
  %s2 = inlined_call_operand.hbm [shape: bf16[128,128], index: 2, kind: input, shape index: {}]
  %s3 = inlined_call_operand.hbm [shape: f32[2,10], index: 3, kind: output, shape index: {}]
  %s4 = sld [smem:[#allocation0]]
  $region34: #{fused_soft_hebb_forward.1} parent=0
    _
  %s6 = ssub.s32 1, %s4
  %s7 = scalar_select 0, %s6, %s4
  $region1: #{fused_soft_hebb_forward.1} parent=0
    #allocation2 [shape = 'u8[32768]{0}', space=vmem, size = 0x8000, scoped, tag = 'input window, operand 0, single buffered']
    #allocation3 [shape = 's32[1]{0}', space=sflag, size = 0x4, scoped, tag = 'scoped memory for fused_soft_hebb_forward.1']
    #allocation4 [shape = 's32[1]{0}', space=sflag, size = 0x4, scoped, tag = 'scoped memory for fused_soft_hebb_forward.1']
    #allocation5 [shape = 'u8[262144]{0}', space=vmem, size = 0x40000, scoped, tag = 'input window, operand 1, single buffered']
    #allocation6 [shape = 's32[1]{0}', space=sflag, size = 0x4, scoped, tag = 'scoped memory for fused_soft_hebb_forward.1']
    #allocation7 [shape = 'u8[32768]{0}', space=vmem, size = 0x8000, scoped, tag = 'input window, operand 2, single buffered']
    #allocation8 [shape = 'u8[4096]{0}', space=vmem, size = 0x1000, scoped, tag = 'output window, operand 0, single buffered']
    %8 = vsyncpa [#allocation3], 0
    %9 = vsyncpa [#allocation6], 0
    %10 = vsyncpa [#allocation4], 0
    // Predicated region
    $region2: #{fused_soft_hebb_forward.1} parent=1 // pred_check
      _
    $region3: #{fused_soft_hebb_forward.1} parent=1 // pred_check_branch
      %12 = sbr.rel (0) target = $region5
    $region4: #{fused_soft_hebb_forward.1} parent=1 // pred_region
      %s14 = ssub.s32 1024, 256
      %15 = vsyncadd [#allocation3], %s14
      %s16 = sshll.u32 [#allocation2], 4
      %s17 = int_to_ptr.vmem [resolvable:$true] %s16
      %22 = dma.hbm_to_vmem [thread:$0]  %s0, 256, %s17, [#allocation3], 256, 256, 16
    $region5: #{fused_soft_hebb_forward.1} parent=1 // pred_fallthru
      _
    // Predicated region
    $region6: #{fused_soft_hebb_forward.1} parent=1 // pred_check
      _
    $region7: #{fused_soft_hebb_forward.1} parent=1 // pred_check_branch
      %24 = sbr.rel (0) target = $region9
    $region8: #{fused_soft_hebb_forward.1} parent=1 // pred_region
      %s26 = ssub.s32 8192, 8192
      %27 = vsyncadd [#allocation6], %s26
      %s28 = sshll.u32 [#allocation5], 4
      %s29 = int_to_ptr.vmem [resolvable:$true] %s28
      %34 = dma.hbm_to_vmem [thread:$0]  %s1, 8192, %s29, [#allocation6], 64, 64, 4
    $region9: #{fused_soft_hebb_forward.1} parent=1 // pred_fallthru
      _
    // Predicated region
    $region10: #{fused_soft_hebb_forward.1} parent=1 // pred_check
      _
    $region11: #{fused_soft_hebb_forward.1} parent=1 // pred_check_branch
      %36 = sbr.rel (0) target = $region13
    $region12: #{fused_soft_hebb_forward.1} parent=1 // pred_region
      %s38 = ssub.s32 1024, 1024
      %39 = vsyncadd [#allocation6], %s38
      %s40 = sshll.u32 [#allocation7], 4
      %s41 = int_to_ptr.vmem [resolvable:$true] %s40
      %46 = dma.hbm_to_vmem [thread:$0]  %s2, 1024, %s41, [#allocation6], 64, 64, 4
    $region13: #{fused_soft_hebb_forward.1} parent=1 // pred_fallthru
      _
    // Predicated region
    $region14: #{fused_soft_hebb_forward.1} parent=1 // pred_check
      _
    $region15: #{fused_soft_hebb_forward.1} parent=1 // pred_check_branch
      %48 = sbr.rel (0) target = $region17
    $region16: #{fused_soft_hebb_forward.1} parent=1 // pred_region
      %49 = dma.done [#allocation3], 1024
    $region17: #{fused_soft_hebb_forward.1} parent=1 // pred_fallthru
      _
    // Predicated region
    $region18: #{fused_soft_hebb_forward.1} parent=1 // pred_check
      _
    $region19: #{fused_soft_hebb_forward.1} parent=1 // pred_check_branch
      %51 = sbr.rel (0) target = $region21
    $region20: #{fused_soft_hebb_forward.1} parent=1 // pred_region
      %52 = dma.done [#allocation6], 8192
    $region21: #{fused_soft_hebb_forward.1} parent=1 // pred_fallthru
      _
    // Predicated region
    $region22: #{fused_soft_hebb_forward.1} parent=1 // pred_check
      _
    $region23: #{fused_soft_hebb_forward.1} parent=1 // pred_check_branch
      %54 = sbr.rel (0) target = $region25
    $region24: #{fused_soft_hebb_forward.1} parent=1 // pred_region
      %55 = dma.done [#allocation6], 1024
    $region25: #{fused_soft_hebb_forward.1} parent=1 // pred_fallthru
      _
    %v57 = vld [vmem:[#allocation2] sm:$0xff]
    %v58 = vld [vmem:[#allocation2 + $0x8] sm:$0xff]
    %v59 = vld [vmem:[#allocation2 + $0x10] sm:$0xff]
    %v60 = vld [vmem:[#allocation2 + $0x18] sm:$0xff]
    %v61 = vld [vmem:[#allocation2 + $0x20] sm:$0xff]
    %v62 = vld [vmem:[#allocation2 + $0x28] sm:$0xff]
    %v63 = vld [vmem:[#allocation2 + $0x30] sm:$0xff]
    %v64 = vld [vmem:[#allocation2 + $0x38] sm:$0xff]
    %v73 = vcombine.low %v57, %v59
    %v74 = vcombine.high %v57, %v59
    %v75 = vcombine.low %v61, %v63
    %v76 = vcombine.high %v61, %v63
    %v78 = vunpack.c.l.s4 1983009808
    %v79 = vunpack.c.0.s8 %v78
    %v80 = vlaneseq
    %v81 = vshrl.u32 %v80, 7
    %v82 = vsub.s32 %v79, %v81
    %v83 = vrot.slane %v73, %v82
    %v85 = vunpack.c.l.s4 1983009808
    %v86 = vunpack.c.0.s8 %v85
    %v87 = vlaneseq
    %v88 = vshrl.u32 %v87, 7
    %v89 = vsub.s32 %v86, %v88
    %v90 = vrot.slane %v74, %v89
    %v92 = vunpack.c.l.s4 1983009808
    %v93 = vunpack.c.0.s8 %v92
    %v94 = vlaneseq
    %v95 = vshrl.u32 %v94, 7
    %v96 = vsub.s32 %v93, %v95
    %v97 = vrot.slane %v75, %v96
    %v99 = vunpack.c.l.s4 1983009808
    %v100 = vunpack.c.0.s8 %v99
    %v101 = vlaneseq
    %v102 = vshrl.u32 %v101, 7
    %v103 = vsub.s32 %v100, %v102
    %v104 = vrot.slane %v76, %v103
    %v105 = vcombine.low %v83, %v97
    %v106 = vcombine.high %v83, %v97
    %v107 = vcombine.low %v90, %v104
    %v108 = vcombine.high %v90, %v104
    %v109 = vcombine.low %v58, %v60
    %v110 = vcombine.high %v58, %v60
    %v111 = vcombine.low %v62, %v64
    %v112 = vcombine.high %v62, %v64
    %v114 = vunpack.c.l.s4 1983009808
    %v115 = vunpack.c.0.s8 %v114
    %v116 = vlaneseq
    %v117 = vshrl.u32 %v116, 7
    %v118 = vsub.s32 %v115, %v117
    %v119 = vrot.slane %v109, %v118
    %v121 = vunpack.c.l.s4 1983009808
    %v122 = vunpack.c.0.s8 %v121
    %v123 = vlaneseq
    %v124 = vshrl.u32 %v123, 7
    %v125 = vsub.s32 %v122, %v124
    %v126 = vrot.slane %v110, %v125
    %v128 = vunpack.c.l.s4 1983009808
    %v129 = vunpack.c.0.s8 %v128
    %v130 = vlaneseq
    %v131 = vshrl.u32 %v130, 7
    %v132 = vsub.s32 %v129, %v131
    %v133 = vrot.slane %v111, %v132
    %v135 = vunpack.c.l.s4 1983009808
    %v136 = vunpack.c.0.s8 %v135
    %v137 = vlaneseq
    %v138 = vshrl.u32 %v137, 7
    %v139 = vsub.s32 %v136, %v138
    %v140 = vrot.slane %v112, %v139
    %v141 = vcombine.low %v119, %v133
    %v142 = vcombine.high %v119, %v133
    %v143 = vcombine.low %v126, %v140
    %v144 = vcombine.high %v126, %v140
    %v153 = vpack.c.bf16 %v105, %v105
    %v154 = vpack.c.bf16 %v106, %v106
    %v155 = vpack.c.bf16 %v107, %v107
    %v156 = vpack.c.bf16 %v108, %v108
    %v157 = vpack.c.bf16 %v141, %v141
    %v158 = vpack.c.bf16 %v142, %v142
    %v159 = vpack.c.bf16 %v143, %v143
    %v160 = vpack.c.bf16 %v144, %v144
    %v161 = vld [vmem:[#allocation5] sm:$0xf]
    %v162 = vld [vmem:[#allocation5 + $0x4] sm:$0xf]
    %v163 = vld [vmem:[#allocation5 + $0x8] sm:$0xf]
    %v164 = vld [vmem:[#allocation5 + $0xc] sm:$0xf]
    %v165 = vld [vmem:[#allocation5 + $0x10] sm:$0xf]
    %v166 = vld [vmem:[#allocation5 + $0x14] sm:$0xf]
    %v167 = vld [vmem:[#allocation5 + $0x18] sm:$0xf]
    %v168 = vld [vmem:[#allocation5 + $0x1c] sm:$0xf]
    %v169 = vld [vmem:[#allocation5 + $0x20] sm:$0xf]
    %v170 = vld [vmem:[#allocation5 + $0x24] sm:$0xf]
    %v171 = vld [vmem:[#allocation5 + $0x28] sm:$0xf]
    %v172 = vld [vmem:[#allocation5 + $0x2c] sm:$0xf]
    %v173 = vld [vmem:[#allocation5 + $0x30] sm:$0xf]
    %v174 = vld [vmem:[#allocation5 + $0x34] sm:$0xf]
    %v175 = vld [vmem:[#allocation5 + $0x38] sm:$0xf]
    %v176 = vld [vmem:[#allocation5 + $0x3c] sm:$0xf]
    %v177 = vld [vmem:[#allocation5 + $0x40] sm:$0xf]
    %v178 = vld [vmem:[#allocation5 + $0x44] sm:$0xf]
    %v179 = vld [vmem:[#allocation5 + $0x48] sm:$0xf]
    %v180 = vld [vmem:[#allocation5 + $0x4c] sm:$0xf]
    %v181 = vld [vmem:[#allocation5 + $0x50] sm:$0xf]
    %v182 = vld [vmem:[#allocation5 + $0x54] sm:$0xf]
    %v183 = vld [vmem:[#allocation5 + $0x58] sm:$0xf]
    %v184 = vld [vmem:[#allocation5 + $0x5c] sm:$0xf]
    %v185 = vld [vmem:[#allocation5 + $0x60] sm:$0xf]
    %v186 = vld [vmem:[#allocation5 + $0x64] sm:$0xf]
    %v187 = vld [vmem:[#allocation5 + $0x68] sm:$0xf]
    %v188 = vld [vmem:[#allocation5 + $0x6c] sm:$0xf]
    %v189 = vld [vmem:[#allocation5 + $0x70] sm:$0xf]
    %v190 = vld [vmem:[#allocation5 + $0x74] sm:$0xf]
    %v191 = vld [vmem:[#allocation5 + $0x78] sm:$0xf]
    %v192 = vld [vmem:[#allocation5 + $0x7c] sm:$0xf]
    %v193 = vld [vmem:[#allocation5 + $0x80] sm:$0xf]
    %v194 = vld [vmem:[#allocation5 + $0x84] sm:$0xf]
    %v195 = vld [vmem:[#allocation5 + $0x88] sm:$0xf]
    %v196 = vld [vmem:[#allocation5 + $0x8c] sm:$0xf]
    %v197 = vld [vmem:[#allocation5 + $0x90] sm:$0xf]
    %v198 = vld [vmem:[#allocation5 + $0x94] sm:$0xf]
    %v199 = vld [vmem:[#allocation5 + $0x98] sm:$0xf]
    %v200 = vld [vmem:[#allocation5 + $0x9c] sm:$0xf]
    %v201 = vld [vmem:[#allocation5 + $0xa0] sm:$0xf]
    %v202 = vld [vmem:[#allocation5 + $0xa4] sm:$0xf]
    %v203 = vld [vmem:[#allocation5 + $0xa8] sm:$0xf]
    %v204 = vld [vmem:[#allocation5 + $0xac] sm:$0xf]
    %v205 = vld [vmem:[#allocation5 + $0xb0] sm:$0xf]
    %v206 = vld [vmem:[#allocation5 + $0xb4] sm:$0xf]
    %v207 = vld [vmem:[#allocation5 + $0xb8] sm:$0xf]
    %v208 = vld [vmem:[#allocation5 + $0xbc] sm:$0xf]
    %v209 = vld [vmem:[#allocation5 + $0xc0] sm:$0xf]
    %v210 = vld [vmem:[#allocation5 + $0xc4] sm:$0xf]
    %v211 = vld [vmem:[#allocation5 + $0xc8] sm:$0xf]
    %v212 = vld [vmem:[#allocation5 + $0xcc] sm:$0xf]
    %v213 = vld [vmem:[#allocation5 + $0xd0] sm:$0xf]
    %v214 = vld [vmem:[#allocation5 + $0xd4] sm:$0xf]
    %v215 = vld [vmem:[#allocation5 + $0xd8] sm:$0xf]
    %v216 = vld [vmem:[#allocation5 + $0xdc] sm:$0xf]
    %v217 = vld [vmem:[#allocation5 + $0xe0] sm:$0xf]
    %v218 = vld [vmem:[#allocation5 + $0xe4] sm:$0xf]
    %v219 = vld [vmem:[#allocation5 + $0xe8] sm:$0xf]
    %v220 = vld [vmem:[#allocation5 + $0xec] sm:$0xf]
    %v221 = vld [vmem:[#allocation5 + $0xf0] sm:$0xf]
    %v222 = vld [vmem:[#allocation5 + $0xf4] sm:$0xf]
    %v223 = vld [vmem:[#allocation5 + $0xf8] sm:$0xf]
    %v224 = vld [vmem:[#allocation5 + $0xfc] sm:$0xf]
    %v225 = vld [vmem:[#allocation5 + $0x100] sm:$0xf]
    %v226 = vld [vmem:[#allocation5 + $0x104] sm:$0xf]
    %v227 = vld [vmem:[#allocation5 + $0x108] sm:$0xf]
    %v228 = vld [vmem:[#allocation5 + $0x10c] sm:$0xf]
    %v229 = vld [vmem:[#allocation5 + $0x110] sm:$0xf]
    %v230 = vld [vmem:[#allocation5 + $0x114] sm:$0xf]
    %v231 = vld [vmem:[#allocation5 + $0x118] sm:$0xf]
    %v232 = vld [vmem:[#allocation5 + $0x11c] sm:$0xf]
    %v233 = vld [vmem:[#allocation5 + $0x120] sm:$0xf]
    %v234 = vld [vmem:[#allocation5 + $0x124] sm:$0xf]
    %v235 = vld [vmem:[#allocation5 + $0x128] sm:$0xf]
    %v236 = vld [vmem:[#allocation5 + $0x12c] sm:$0xf]
    %v237 = vld [vmem:[#allocation5 + $0x130] sm:$0xf]
    %v238 = vld [vmem:[#allocation5 + $0x134] sm:$0xf]
    %v239 = vld [vmem:[#allocation5 + $0x138] sm:$0xf]
    %v240 = vld [vmem:[#allocation5 + $0x13c] sm:$0xf]
    %v241 = vld [vmem:[#allocation5 + $0x140] sm:$0xf]
    %v242 = vld [vmem:[#allocation5 + $0x144] sm:$0xf]
    %v243 = vld [vmem:[#allocation5 + $0x148] sm:$0xf]
    %v244 = vld [vmem:[#allocation5 + $0x14c] sm:$0xf]
    %v245 = vld [vmem:[#allocation5 + $0x150] sm:$0xf]
    %v246 = vld [vmem:[#allocation5 + $0x154] sm:$0xf]
    %v247 = vld [vmem:[#allocation5 + $0x158] sm:$0xf]
    %v248 = vld [vmem:[#allocation5 + $0x15c] sm:$0xf]
    %v249 = vld [vmem:[#allocation5 + $0x160] sm:$0xf]
    %v250 = vld [vmem:[#allocation5 + $0x164] sm:$0xf]
    %v251 = vld [vmem:[#allocation5 + $0x168] sm:$0xf]
    %v252 = vld [vmem:[#allocation5 + $0x16c] sm:$0xf]
    %v253 = vld [vmem:[#allocation5 + $0x170] sm:$0xf]
    %v254 = vld [vmem:[#allocation5 + $0x174] sm:$0xf]
    %v255 = vld [vmem:[#allocation5 + $0x178] sm:$0xf]
    %v256 = vld [vmem:[#allocation5 + $0x17c] sm:$0xf]
    %v257 = vld [vmem:[#allocation5 + $0x180] sm:$0xf]
    %v258 = vld [vmem:[#allocation5 + $0x184] sm:$0xf]
    %v259 = vld [vmem:[#allocation5 + $0x188] sm:$0xf]
    %v260 = vld [vmem:[#allocation5 + $0x18c] sm:$0xf]
    %v261 = vld [vmem:[#allocation5 + $0x190] sm:$0xf]
    %v262 = vld [vmem:[#allocation5 + $0x194] sm:$0xf]
    %v263 = vld [vmem:[#allocation5 + $0x198] sm:$0xf]
    %v264 = vld [vmem:[#allocation5 + $0x19c] sm:$0xf]
    %v265 = vld [vmem:[#allocation5 + $0x1a0] sm:$0xf]
    %v266 = vld [vmem:[#allocation5 + $0x1a4] sm:$0xf]
    %v267 = vld [vmem:[#allocation5 + $0x1a8] sm:$0xf]
    %v268 = vld [vmem:[#allocation5 + $0x1ac] sm:$0xf]
    %v269 = vld [vmem:[#allocation5 + $0x1b0] sm:$0xf]
    %v270 = vld [vmem:[#allocation5 + $0x1b4] sm:$0xf]
    %v271 = vld [vmem:[#allocation5 + $0x1b8] sm:$0xf]
    %v272 = vld [vmem:[#allocation5 + $0x1bc] sm:$0xf]
    %v273 = vld [vmem:[#allocation5 + $0x1c0] sm:$0xf]
    %v274 = vld [vmem:[#allocation5 + $0x1c4] sm:$0xf]
    %v275 = vld [vmem:[#allocation5 + $0x1c8] sm:$0xf]
    %v276 = vld [vmem:[#allocation5 + $0x1cc] sm:$0xf]
    %v277 = vld [vmem:[#allocation5 + $0x1d0] sm:$0xf]
    %v278 = vld [vmem:[#allocation5 + $0x1d4] sm:$0xf]
    %v279 = vld [vmem:[#allocation5 + $0x1d8] sm:$0xf]
    %v280 = vld [vmem:[#allocation5 + $0x1dc] sm:$0xf]
    %v281 = vld [vmem:[#allocation5 + $0x1e0] sm:$0xf]
    %v282 = vld [vmem:[#allocation5 + $0x1e4] sm:$0xf]
    %v283 = vld [vmem:[#allocation5 + $0x1e8] sm:$0xf]
    %v284 = vld [vmem:[#allocation5 + $0x1ec] sm:$0xf]
    %v285 = vld [vmem:[#allocation5 + $0x1f0] sm:$0xf]
    %v286 = vld [vmem:[#allocation5 + $0x1f4] sm:$0xf]
    %v287 = vld [vmem:[#allocation5 + $0x1f8] sm:$0xf]
    %v288 = vld [vmem:[#allocation5 + $0x1fc] sm:$0xf]
    %v289 = vld [vmem:[#allocation7] sm:$0xf]
    %v290 = vld [vmem:[#allocation7 + $0x4] sm:$0xf]
    %v291 = vld [vmem:[#allocation7 + $0x8] sm:$0xf]
    %v292 = vld [vmem:[#allocation7 + $0xc] sm:$0xf]
    %v293 = vld [vmem:[#allocation7 + $0x10] sm:$0xf]
    %v294 = vld [vmem:[#allocation7 + $0x14] sm:$0xf]
    %v295 = vld [vmem:[#allocation7 + $0x18] sm:$0xf]
    %v296 = vld [vmem:[#allocation7 + $0x1c] sm:$0xf]
    %v297 = vld [vmem:[#allocation7 + $0x20] sm:$0xf]
    %v298 = vld [vmem:[#allocation7 + $0x24] sm:$0xf]
    %v299 = vld [vmem:[#allocation7 + $0x28] sm:$0xf]
    %v300 = vld [vmem:[#allocation7 + $0x2c] sm:$0xf]
    %v301 = vld [vmem:[#allocation7 + $0x30] sm:$0xf]
    %v302 = vld [vmem:[#allocation7 + $0x34] sm:$0xf]
    %v303 = vld [vmem:[#allocation7 + $0x38] sm:$0xf]
    %v304 = vld [vmem:[#allocation7 + $0x3c] sm:$0xf]
    %v305 = vlaneseq
    %v306 = vand.u32 %v305, 127
    %vm307 = vcmp.lt.s32.totalorder %v306, 32
    %v308 = vsel %vm307, 0.0, -1e+30
    %v437 = vunpack.c.l.b16 %v161
    %v438 = vunpack.c.l.b16 %v162
    %v439 = vunpack.c.l.b16 %v163
    %v440 = vunpack.c.l.b16 %v164
    %v441 = vunpack.c.l.b16 %v165
    %v442 = vunpack.c.l.b16 %v166
    %v443 = vunpack.c.l.b16 %v167
    %v444 = vunpack.c.l.b16 %v168
    %v445 = vunpack.c.l.b16 %v169
    %v446 = vunpack.c.l.b16 %v170
    %v447 = vunpack.c.l.b16 %v171
    %v448 = vunpack.c.l.b16 %v172
    %v449 = vunpack.c.l.b16 %v173
    %v450 = vunpack.c.l.b16 %v174
    %v451 = vunpack.c.l.b16 %v175
    %v452 = vunpack.c.l.b16 %v176
    %v453 = vunpack.c.l.b16 %v177
    %v454 = vunpack.c.l.b16 %v178
    %v455 = vunpack.c.l.b16 %v179
    %v456 = vunpack.c.l.b16 %v180
    %v457 = vunpack.c.l.b16 %v181
    %v458 = vunpack.c.l.b16 %v182
    %v459 = vunpack.c.l.b16 %v183
    %v460 = vunpack.c.l.b16 %v184
    %v461 = vunpack.c.l.b16 %v185
    %v462 = vunpack.c.l.b16 %v186
    %v463 = vunpack.c.l.b16 %v187
    %v464 = vunpack.c.l.b16 %v188
    %v465 = vunpack.c.l.b16 %v189
    %v466 = vunpack.c.l.b16 %v190
    %v467 = vunpack.c.l.b16 %v191
    %v468 = vunpack.c.l.b16 %v192
    %v469 = vunpack.c.l.b16 %v193
    %v470 = vunpack.c.l.b16 %v194
    %v471 = vunpack.c.l.b16 %v195
    %v472 = vunpack.c.l.b16 %v196
    %v473 = vunpack.c.l.b16 %v197
    %v474 = vunpack.c.l.b16 %v198
    %v475 = vunpack.c.l.b16 %v199
    %v476 = vunpack.c.l.b16 %v200
    %v477 = vunpack.c.l.b16 %v201
    %v478 = vunpack.c.l.b16 %v202
    %v479 = vunpack.c.l.b16 %v203
    %v480 = vunpack.c.l.b16 %v204
    %v481 = vunpack.c.l.b16 %v205
    %v482 = vunpack.c.l.b16 %v206
    %v483 = vunpack.c.l.b16 %v207
    %v484 = vunpack.c.l.b16 %v208
    %v485 = vunpack.c.l.b16 %v209
    %v486 = vunpack.c.l.b16 %v210
    %v487 = vunpack.c.l.b16 %v211
    %v488 = vunpack.c.l.b16 %v212
    %v489 = vunpack.c.l.b16 %v213
    %v490 = vunpack.c.l.b16 %v214
    %v491 = vunpack.c.l.b16 %v215
    %v492 = vunpack.c.l.b16 %v216
    %v493 = vunpack.c.l.b16 %v217
    %v494 = vunpack.c.l.b16 %v218
    %v495 = vunpack.c.l.b16 %v219
    %v496 = vunpack.c.l.b16 %v220
    %v497 = vunpack.c.l.b16 %v221
    %v498 = vunpack.c.l.b16 %v222
    %v499 = vunpack.c.l.b16 %v223
    %v500 = vunpack.c.l.b16 %v224
    %v501 = vunpack.c.l.b16 %v225
    %v502 = vunpack.c.l.b16 %v226
    %v503 = vunpack.c.l.b16 %v227
    %v504 = vunpack.c.l.b16 %v228
    %v505 = vunpack.c.l.b16 %v229
    %v506 = vunpack.c.l.b16 %v230
    %v507 = vunpack.c.l.b16 %v231
    %v508 = vunpack.c.l.b16 %v232
    %v509 = vunpack.c.l.b16 %v233
    %v510 = vunpack.c.l.b16 %v234
    %v511 = vunpack.c.l.b16 %v235
    %v512 = vunpack.c.l.b16 %v236
    %v513 = vunpack.c.l.b16 %v237
    %v514 = vunpack.c.l.b16 %v238
    %v515 = vunpack.c.l.b16 %v239
    %v516 = vunpack.c.l.b16 %v240
    %v517 = vunpack.c.l.b16 %v241
    %v518 = vunpack.c.l.b16 %v242
    %v519 = vunpack.c.l.b16 %v243
    %v520 = vunpack.c.l.b16 %v244
    %v521 = vunpack.c.l.b16 %v245
    %v522 = vunpack.c.l.b16 %v246
    %v523 = vunpack.c.l.b16 %v247
    %v524 = vunpack.c.l.b16 %v248
    %v525 = vunpack.c.l.b16 %v249
    %v526 = vunpack.c.l.b16 %v250
    %v527 = vunpack.c.l.b16 %v251
    %v528 = vunpack.c.l.b16 %v252
    %v529 = vunpack.c.l.b16 %v253
    %v530 = vunpack.c.l.b16 %v254
    %v531 = vunpack.c.l.b16 %v255
    %v532 = vunpack.c.l.b16 %v256
    %v533 = vunpack.c.l.b16 %v257
    %v534 = vunpack.c.l.b16 %v258
    %v535 = vunpack.c.l.b16 %v259
    %v536 = vunpack.c.l.b16 %v260
    %v537 = vunpack.c.l.b16 %v261
    %v538 = vunpack.c.l.b16 %v262
    %v539 = vunpack.c.l.b16 %v263
    %v540 = vunpack.c.l.b16 %v264
    %v541 = vunpack.c.l.b16 %v265
    %v542 = vunpack.c.l.b16 %v266
    %v543 = vunpack.c.l.b16 %v267
    %v544 = vunpack.c.l.b16 %v268
    %v545 = vunpack.c.l.b16 %v269
    %v546 = vunpack.c.l.b16 %v270
    %v547 = vunpack.c.l.b16 %v271
    %v548 = vunpack.c.l.b16 %v272
    %v549 = vunpack.c.l.b16 %v273
    %v550 = vunpack.c.l.b16 %v274
    %v551 = vunpack.c.l.b16 %v275
    %v552 = vunpack.c.l.b16 %v276
    %v553 = vunpack.c.l.b16 %v277
    %v554 = vunpack.c.l.b16 %v278
    %v555 = vunpack.c.l.b16 %v279
    %v556 = vunpack.c.l.b16 %v280
    %v557 = vunpack.c.l.b16 %v281
    %v558 = vunpack.c.l.b16 %v282
    %v559 = vunpack.c.l.b16 %v283
    %v560 = vunpack.c.l.b16 %v284
    %v561 = vunpack.c.l.b16 %v285
    %v562 = vunpack.c.l.b16 %v286
    %v563 = vunpack.c.l.b16 %v287
    %v564 = vunpack.c.l.b16 %v288
    %v565 = vpack.c.b16 %v438, %v437
    %v566 = vpack.c.b16 %v440, %v439
    %v567 = vpack.c.b16 %v442, %v441
    %v568 = vpack.c.b16 %v444, %v443
    %v569 = vpack.c.b16 %v446, %v445
    %v570 = vpack.c.b16 %v448, %v447
    %v571 = vpack.c.b16 %v450, %v449
    %v572 = vpack.c.b16 %v452, %v451
    %v573 = vpack.c.b16 %v454, %v453
    %v574 = vpack.c.b16 %v456, %v455
    %v575 = vpack.c.b16 %v458, %v457
    %v576 = vpack.c.b16 %v460, %v459
    %v577 = vpack.c.b16 %v462, %v461
    %v578 = vpack.c.b16 %v464, %v463
    %v579 = vpack.c.b16 %v466, %v465
    %v580 = vpack.c.b16 %v468, %v467
    %v581 = vpack.c.b16 %v470, %v469
    %v582 = vpack.c.b16 %v472, %v471
    %v583 = vpack.c.b16 %v474, %v473
    %v584 = vpack.c.b16 %v476, %v475
    %v585 = vpack.c.b16 %v478, %v477
    %v586 = vpack.c.b16 %v480, %v479
    %v587 = vpack.c.b16 %v482, %v481
    %v588 = vpack.c.b16 %v484, %v483
    %v589 = vpack.c.b16 %v486, %v485
    %v590 = vpack.c.b16 %v488, %v487
    %v591 = vpack.c.b16 %v490, %v489
    %v592 = vpack.c.b16 %v492, %v491
    %v593 = vpack.c.b16 %v494, %v493
    %v594 = vpack.c.b16 %v496, %v495
    %v595 = vpack.c.b16 %v498, %v497
    %v596 = vpack.c.b16 %v500, %v499
    %v597 = vpack.c.b16 %v502, %v501
    %v598 = vpack.c.b16 %v504, %v503
    %v599 = vpack.c.b16 %v506, %v505
    %v600 = vpack.c.b16 %v508, %v507
    %v601 = vpack.c.b16 %v510, %v509
    %v602 = vpack.c.b16 %v512, %v511
    %v603 = vpack.c.b16 %v514, %v513
    %v604 = vpack.c.b16 %v516, %v515
    %v605 = vpack.c.b16 %v518, %v517
    %v606 = vpack.c.b16 %v520, %v519
    %v607 = vpack.c.b16 %v522, %v521
    %v608 = vpack.c.b16 %v524, %v523
    %v609 = vpack.c.b16 %v526, %v525
    %v610 = vpack.c.b16 %v528, %v527
    %v611 = vpack.c.b16 %v530, %v529
    %v612 = vpack.c.b16 %v532, %v531
    %v613 = vpack.c.b16 %v534, %v533
    %v614 = vpack.c.b16 %v536, %v535
    %v615 = vpack.c.b16 %v538, %v537
    %v616 = vpack.c.b16 %v540, %v539
    %v617 = vpack.c.b16 %v542, %v541
    %v618 = vpack.c.b16 %v544, %v543
    %v619 = vpack.c.b16 %v546, %v545
    %v620 = vpack.c.b16 %v548, %v547
    %v621 = vpack.c.b16 %v550, %v549
    %v622 = vpack.c.b16 %v552, %v551
    %v623 = vpack.c.b16 %v554, %v553
    %v624 = vpack.c.b16 %v556, %v555
    %v625 = vpack.c.b16 %v558, %v557
    %v626 = vpack.c.b16 %v560, %v559
    %v627 = vpack.c.b16 %v562, %v561
    %v628 = vpack.c.b16 %v564, %v563
    %693 = vmatprep.subr.bf16.mxu0 0
    %694 = vmatpush1.bf16.msra.mxu0 %v565
    %695 = vmatprep.subr.bf16.mxu0 0
    %696 = vmatpush1.bf16.msra.mxu0 %v566
    %697 = vmatprep.subr.bf16.mxu0 0
    %698 = vmatpush1.bf16.msra.mxu0 %v567
    %699 = vmatprep.subr.bf16.mxu0 0
    %700 = vmatpush1.bf16.msra.mxu0 %v568
    %701 = vmatprep.subr.bf16.mxu0 0
    %702 = vmatpush1.bf16.msra.mxu0 %v569
    %703 = vmatprep.subr.bf16.mxu0 0
    %704 = vmatpush1.bf16.msra.mxu0 %v570
    %705 = vmatprep.subr.bf16.mxu0 0
    %706 = vmatpush1.bf16.msra.mxu0 %v571
    %707 = vmatprep.subr.bf16.mxu0 0
    %708 = vmatpush1.bf16.msra.mxu0 %v572
    %709 = vmatprep.subr.bf16.mxu0 0
    %710 = vmatpush1.bf16.msra.mxu0 %v573
    %711 = vmatprep.subr.bf16.mxu0 0
    %712 = vmatpush1.bf16.msra.mxu0 %v574
    %713 = vmatprep.subr.bf16.mxu0 0
    %714 = vmatpush1.bf16.msra.mxu0 %v575
    %715 = vmatprep.subr.bf16.mxu0 0
    %716 = vmatpush1.bf16.msra.mxu0 %v576
    %717 = vmatprep.subr.bf16.mxu0 0
    %718 = vmatpush1.bf16.msra.mxu0 %v577
    %719 = vmatprep.subr.bf16.mxu0 0
    %720 = vmatpush1.bf16.msra.mxu0 %v578
    %721 = vmatprep.subr.bf16.mxu0 0
    %722 = vmatpush1.bf16.msra.mxu0 %v579
    %723 = vmatprep.subr.bf16.mxu0 0
    %724 = vmatpush1.bf16.msra.mxu0 %v580
    %725 = vmatprep.mubr.bf16.mxu0 %v154
    %726 = vmatmul.mubr.bf16.gmra.mrb[0].mxu0 %v153
    %v727 = vpop.f32.mrb[0].mxu0
    %v728 = vadd.f32 %v308, %v727
    %v729 = vpop.f32.mrb[0].mxu0
    %v730 = vpop.f32.mrb[0].mxu0
    %v731 = vpop.f32.mrb[0].mxu0
    %732 = vdwg.mxu0
    %733 = vmatprep.subr.bf16.mxu0 0
    %734 = vmatpush1.bf16.msra.mxu0 %v581
    %735 = vmatprep.subr.bf16.mxu0 0
    %736 = vmatpush1.bf16.msra.mxu0 %v582
    %737 = vmatprep.subr.bf16.mxu0 0
    %738 = vmatpush1.bf16.msra.mxu0 %v583
    %739 = vmatprep.subr.bf16.mxu0 0
    %740 = vmatpush1.bf16.msra.mxu0 %v584
    %741 = vmatprep.subr.bf16.mxu0 0
    %742 = vmatpush1.bf16.msra.mxu0 %v585
    %743 = vmatprep.subr.bf16.mxu0 0
    %744 = vmatpush1.bf16.msra.mxu0 %v586
    %745 = vmatprep.subr.bf16.mxu0 0
    %746 = vmatpush1.bf16.msra.mxu0 %v587
    %747 = vmatprep.subr.bf16.mxu0 0
    %748 = vmatpush1.bf16.msra.mxu0 %v588
    %749 = vmatprep.subr.bf16.mxu0 0
    %750 = vmatpush1.bf16.msra.mxu0 %v589
    %751 = vmatprep.subr.bf16.mxu0 0
    %752 = vmatpush1.bf16.msra.mxu0 %v590
    %753 = vmatprep.subr.bf16.mxu0 0
    %754 = vmatpush1.bf16.msra.mxu0 %v591
    %755 = vmatprep.subr.bf16.mxu0 0
    %756 = vmatpush1.bf16.msra.mxu0 %v592
    %757 = vmatprep.subr.bf16.mxu0 0
    %758 = vmatpush1.bf16.msra.mxu0 %v593
    %759 = vmatprep.subr.bf16.mxu0 0
    %760 = vmatpush1.bf16.msra.mxu0 %v594
    %761 = vmatprep.subr.bf16.mxu0 0
    %762 = vmatpush1.bf16.msra.mxu0 %v595
    %763 = vmatprep.subr.bf16.mxu0 0
    %764 = vmatpush1.bf16.msra.mxu0 %v596
    %765 = vmatprep.mubr.bf16.mxu0 %v156
    %766 = vmatmul.mubr.bf16.gmra.mrb[0].mxu0 %v155
    %v767 = vpop.f32.mrb[0].mxu0
    %v768 = vadd.f32 %v728, %v767
    %v769 = vpop.f32.mrb[0].mxu0
    %v770 = vpop.f32.mrb[0].mxu0
    %v771 = vpop.f32.mrb[0].mxu0
    %772 = vdwg.mxu0
    %773 = vmatprep.subr.bf16.mxu0 0
    %774 = vmatpush1.bf16.msra.mxu0 %v597
    %775 = vmatprep.subr.bf16.mxu0 0
    %776 = vmatpush1.bf16.msra.mxu0 %v598
    %777 = vmatprep.subr.bf16.mxu0 0
    %778 = vmatpush1.bf16.msra.mxu0 %v599
    %779 = vmatprep.subr.bf16.mxu0 0
    %780 = vmatpush1.bf16.msra.mxu0 %v600
    %781 = vmatprep.subr.bf16.mxu0 0
    %782 = vmatpush1.bf16.msra.mxu0 %v601
    %783 = vmatprep.subr.bf16.mxu0 0
    %784 = vmatpush1.bf16.msra.mxu0 %v602
    %785 = vmatprep.subr.bf16.mxu0 0
    %786 = vmatpush1.bf16.msra.mxu0 %v603
    %787 = vmatprep.subr.bf16.mxu0 0
    %788 = vmatpush1.bf16.msra.mxu0 %v604
    %789 = vmatprep.subr.bf16.mxu0 0
    %790 = vmatpush1.bf16.msra.mxu0 %v605
    %791 = vmatprep.subr.bf16.mxu0 0
    %792 = vmatpush1.bf16.msra.mxu0 %v606
    %793 = vmatprep.subr.bf16.mxu0 0
    %794 = vmatpush1.bf16.msra.mxu0 %v607
    %795 = vmatprep.subr.bf16.mxu0 0
    %796 = vmatpush1.bf16.msra.mxu0 %v608
    %797 = vmatprep.subr.bf16.mxu0 0
    %798 = vmatpush1.bf16.msra.mxu0 %v609
    %799 = vmatprep.subr.bf16.mxu0 0
    %800 = vmatpush1.bf16.msra.mxu0 %v610
    %801 = vmatprep.subr.bf16.mxu0 0
    %802 = vmatpush1.bf16.msra.mxu0 %v611
    %803 = vmatprep.subr.bf16.mxu0 0
    %804 = vmatpush1.bf16.msra.mxu0 %v612
    %805 = vmatprep.mubr.bf16.mxu0 %v158
    %806 = vmatmul.mubr.bf16.gmra.mrb[0].mxu0 %v157
    %v807 = vpop.f32.mrb[0].mxu0
    %v808 = vadd.f32 %v768, %v807
    %v809 = vpop.f32.mrb[0].mxu0
    %v810 = vpop.f32.mrb[0].mxu0
    %v811 = vpop.f32.mrb[0].mxu0
    %812 = vdwg.mxu0
    %813 = vmatprep.subr.bf16.mxu0 0
    %814 = vmatpush1.bf16.msra.mxu0 %v613
    %815 = vmatprep.subr.bf16.mxu0 0
    %816 = vmatpush1.bf16.msra.mxu0 %v614
    %817 = vmatprep.subr.bf16.mxu0 0
    %818 = vmatpush1.bf16.msra.mxu0 %v615
    %819 = vmatprep.subr.bf16.mxu0 0
    %820 = vmatpush1.bf16.msra.mxu0 %v616
    %821 = vmatprep.subr.bf16.mxu0 0
    %822 = vmatpush1.bf16.msra.mxu0 %v617
    %823 = vmatprep.subr.bf16.mxu0 0
    %824 = vmatpush1.bf16.msra.mxu0 %v618
    %825 = vmatprep.subr.bf16.mxu0 0
    %826 = vmatpush1.bf16.msra.mxu0 %v619
    %827 = vmatprep.subr.bf16.mxu0 0
    %828 = vmatpush1.bf16.msra.mxu0 %v620
    %829 = vmatprep.subr.bf16.mxu0 0
    %830 = vmatpush1.bf16.msra.mxu0 %v621
    %831 = vmatprep.subr.bf16.mxu0 0
    %832 = vmatpush1.bf16.msra.mxu0 %v622
    %833 = vmatprep.subr.bf16.mxu0 0
    %834 = vmatpush1.bf16.msra.mxu0 %v623
    %835 = vmatprep.subr.bf16.mxu0 0
    %836 = vmatpush1.bf16.msra.mxu0 %v624
    %837 = vmatprep.subr.bf16.mxu0 0
    %838 = vmatpush1.bf16.msra.mxu0 %v625
    %839 = vmatprep.subr.bf16.mxu0 0
    %840 = vmatpush1.bf16.msra.mxu0 %v626
    %841 = vmatprep.subr.bf16.mxu0 0
    %842 = vmatpush1.bf16.msra.mxu0 %v627
    %843 = vmatprep.subr.bf16.mxu0 0
    %844 = vmatpush1.bf16.msra.mxu0 %v628
    %845 = vmatprep.mubr.bf16.mxu0 %v160
    %846 = vmatmul.mubr.bf16.gmra.mrb[0].mxu0 %v159
    %v847 = vpop.f32.mrb[0].mxu0
    %v848 = vadd.f32 %v808, %v847
    %v849 = vpop.f32.mrb[0].mxu0
    %v850 = vpop.f32.mrb[0].mxu0
    %v851 = vpop.f32.mrb[0].mxu0
    %852 = vdwg.mxu0
    %853 = vmax.xlane.f32.xlu0 %v848
    %v854 = vpop.xlane.xlu0 %853
    %v855 = vsub.f32 %v848, %v854
    %v856 = vmul.f32 %v855, 1.442695
    %v857 = vpow.pop %v856
    %858 = vadd.xlane.f32.xlu0 %v857
    %v859 = vpop.xlane.xlu0 %858
    %v860 = vrcp.pop %v859
    %v861 = vmul.f32 %v857, %v860
    %v862 = vpack.c.bf16 %v861, %v861
    %vm863 = vcmp.lt.s32.totalorder %v306, 10
    %v864 = vsel %vm863, 0.0, -1e+30
    %v881 = vunpack.c.l.b16 %v289
    %v882 = vunpack.c.l.b16 %v290
    %v883 = vunpack.c.l.b16 %v291
    %v884 = vunpack.c.l.b16 %v292
    %v885 = vunpack.c.l.b16 %v293
    %v886 = vunpack.c.l.b16 %v294
    %v887 = vunpack.c.l.b16 %v295
    %v888 = vunpack.c.l.b16 %v296
    %v889 = vunpack.c.l.b16 %v297
    %v890 = vunpack.c.l.b16 %v298
    %v891 = vunpack.c.l.b16 %v299
    %v892 = vunpack.c.l.b16 %v300
    %v893 = vunpack.c.l.b16 %v301
    %v894 = vunpack.c.l.b16 %v302
    %v895 = vunpack.c.l.b16 %v303
    %v896 = vunpack.c.l.b16 %v304
    %v897 = vpack.c.b16 %v882, %v881
    %v898 = vpack.c.b16 %v884, %v883
    %v899 = vpack.c.b16 %v886, %v885
    %v900 = vpack.c.b16 %v888, %v887
    %v901 = vpack.c.b16 %v890, %v889
    %v902 = vpack.c.b16 %v892, %v891
    %v903 = vpack.c.b16 %v894, %v893
    %v904 = vpack.c.b16 %v896, %v895
    %913 = vmatprep.subr.bf16.mxu0 0
    %914 = vmatpush1.bf16.msra.mxu0 %v897
    %915 = vmatprep.subr.bf16.mxu0 0
    %916 = vmatpush1.bf16.msra.mxu0 %v898
    %917 = vmatprep.subr.bf16.mxu0 0
    %918 = vmatpush1.bf16.msra.mxu0 %v899
    %919 = vmatprep.subr.bf16.mxu0 0
    %920 = vmatpush1.bf16.msra.mxu0 %v900
    %921 = vmatprep.subr.bf16.mxu0 0
    %922 = vmatpush1.bf16.msra.mxu0 %v901
    %923 = vmatprep.subr.bf16.mxu0 0
    %924 = vmatpush1.bf16.msra.mxu0 %v902
    %925 = vmatprep.subr.bf16.mxu0 0
    %926 = vmatpush1.bf16.msra.mxu0 %v903
    %927 = vmatprep.subr.bf16.mxu0 0
    %928 = vmatpush1.bf16.msra.mxu0 %v904
    %929 = vmatprep.subr.bf16.mxu0 0
    %930 = vmatpush1.bf16.msra.mxu0 0
    %931 = vmatprep.subr.bf16.mxu0 0
    %932 = vmatpush1.bf16.msra.mxu0 0
    %933 = vmatprep.subr.bf16.mxu0 0
    %934 = vmatpush1.bf16.msra.mxu0 0
    %935 = vmatprep.subr.bf16.mxu0 0
    %936 = vmatpush1.bf16.msra.mxu0 0
    %937 = vmatprep.subr.bf16.mxu0 0
    %938 = vmatpush1.bf16.msra.mxu0 0
    %939 = vmatprep.subr.bf16.mxu0 0
    %940 = vmatpush1.bf16.msra.mxu0 0
    %941 = vmatprep.subr.bf16.mxu0 0
    %942 = vmatpush1.bf16.msra.mxu0 0
    %943 = vmatprep.subr.bf16.mxu0 0
    %944 = vmatpush1.bf16.msra.mxu0 0
    %945 = vmatprep.mubr.bf16.mxu0 0
    %946 = vmatmul.mubr.bf16.gmra.mrb[0].mxu0 %v862
    %v947 = vpop.f32.mrb[0].mxu0
    %v948 = vadd.f32 %v864, %v947
    %v949 = vpop.f32.mrb[0].mxu0
    %v950 = vpop.f32.mrb[0].mxu0
    %v951 = vpop.f32.mrb[0].mxu0
    %952 = vdwg.mxu0
    %953 = vmax.xlane.f32.xlu0 %v948
    %v954 = vpop.xlane.xlu0 %953
    %v955 = vsub.f32 %v948, %v954
    %v956 = vmul.f32 %v955, 1.442695
    %v957 = vpow.pop %v956
    %958 = vadd.xlane.f32.xlu0 %v957
    %v959 = vpop.xlane.xlu0 %958
    %v960 = vrcp.pop %v959
    %v961 = vmul.f32 %v957, %v960
    %vm962 = vcmask 80896
    %963 = vst.msk [vmem:[#allocation8] sm:$0xff] %vm962, %v961
    // Predicated region
    $region26: #{fused_soft_hebb_forward.1} parent=1 // pred_check
      _
    $region27: #{fused_soft_hebb_forward.1} parent=1 // pred_check_branch
      %965 = sbr.rel (0) target = $region29
    $region28: #{fused_soft_hebb_forward.1} parent=1 // pred_region
      %s967 = ssub.s32 128, 32
      %968 = vsyncadd [#allocation4], %s967
      %s969 = sshll.u32 [#allocation8], 4
      %s970 = int_to_ptr.vmem [resolvable:$true] %s969
      %975 = dma.vmem_to_hbm [thread:$0]  %s970, 32, %s3, [#allocation4], 32, 32, 2
    $region29: #{fused_soft_hebb_forward.1} parent=1 // pred_fallthru
      _
    // Predicated region
    $region30: #{fused_soft_hebb_forward.1} parent=1 // pred_check
      _
    $region31: #{fused_soft_hebb_forward.1} parent=1 // pred_check_branch
      %977 = sbr.rel (0) target = $region33
    $region32: #{fused_soft_hebb_forward.1} parent=1 // pred_region
      %978 = dma.done [#allocation4], 128
    $region33: #{fused_soft_hebb_forward.1} parent=1 // pred_fallthru
      _
    %979 = vsyncpa [#allocation3], 1
    %980 = vsyncpa [#allocation6], 1
    %981 = vsyncpa [#allocation4], 1

</llo_original>
